<compile_context>
chip_gen: v6e
topology: v6e:2x2x1
jax: 0.10.0
libtpu: 0.0.40
codegen_flags: <defaults>
</compile_context>

<pallas_src>
import functools

import jax
import jax.numpy as jnp
from jax.experimental import pallas as pl
from jax.experimental.pallas import tpu as pltpu


# ----------------------------------------------------------------------------
# Fused single-pass kernel: one block = (Bt, F, S) with S = D*H*W full extent.
# ----------------------------------------------------------------------------
def _fused_gate_kernel(x_ref, w1t_ref, b1_ref, w2t_ref, b2_ref, o_ref):
    xb = x_ref[...]                                     # (Bt, F, S), native dtype
    bt = xb.shape[0]
    inv_s = 1.0 / xb.shape[-1]

    ssum = jnp.sum(xb, axis=-1, dtype=jnp.float32)      # (Bt, F) f32 accumulation
    smax = jnp.max(xb, axis=-1).astype(jnp.float32)     # (Bt, F)
    avg = ssum * inv_s                                  # mean via constant mul

    # Shared MLP over the stacked pooled vectors: one (2Bt,F)@(F,F2) pass.
    pooled = jnp.concatenate([avg, smax], axis=0)       # (2Bt, F)
    h = jnp.dot(pooled, w1t_ref[...], preferred_element_type=jnp.float32) + b1_ref[...]
    h = jnp.maximum(h, 0.0)
    att2 = jnp.dot(h, w2t_ref[...], preferred_element_type=jnp.float32) + b2_ref[...]
    att = att2[:bt] + att2[bt:]                         # mlp(avg) + mlp(max)
    scale = jax.nn.sigmoid(att).astype(xb.dtype)        # (Bt, F)

    # Native-dtype broadcast multiply + full-tile store (no f32 round trip).
    o_ref[...] = xb * scale[:, :, None]


# ----------------------------------------------------------------------------
# Spatial-tiling fallback, pass 1: chunked sum/max reduction + MLP -> scale.
# Grid = (B blocks, S chunks); scale block is resident across the S axis.
# ----------------------------------------------------------------------------
def _pool_mlp_kernel(x_ref, w1t_ref, b1_ref, w2t_ref, b2_ref, scale_ref,
                     sum_acc, max_acc, *, s_true, sc, ns):
    s = pl.program_id(1)

    @pl.when(s == 0)
    def _():
        sum_acc[...] = jnp.zeros_like(sum_acc)
        max_acc[...] = jnp.full_like(max_acc, -jnp.inf)

    xb = x_ref[...]                                     # (Bt, F, sc)
    rem = s_true - (ns - 1) * sc                        # valid lanes in last chunk

    def _accumulate(vals_sum, vals_max):
        sum_acc[...] += jnp.sum(vals_sum, axis=-1, dtype=jnp.float32)
        max_acc[...] = jnp.maximum(
            max_acc[...], jnp.max(vals_max, axis=-1).astype(jnp.float32))

    if rem == sc:                 # chunk size divides S: every chunk is full
        _accumulate(xb, xb)
    else:                         # only the final chunk has a ragged tail
        @pl.when(s < ns - 1)
        def _():
            _accumulate(xb, xb)

        @pl.when(s == ns - 1)
        def _():
            lane = jax.lax.broadcasted_iota(jnp.int32, xb.shape, 2)
            valid = lane < rem
            _accumulate(jnp.where(valid, xb, jnp.zeros_like(xb)),
                        jnp.where(valid, xb, jnp.full_like(xb, -jnp.inf)))

    @pl.when(s == ns - 1)
    def _():
        avg = sum_acc[...] * (1.0 / s_true)             # (Bt, F)
        bt = avg.shape[0]
        pooled = jnp.concatenate([avg, max_acc[...]], axis=0)
        h = jnp.dot(pooled, w1t_ref[...], preferred_element_type=jnp.float32) + b1_ref[...]
        h = jnp.maximum(h, 0.0)
        att2 = jnp.dot(h, w2t_ref[...], preferred_element_type=jnp.float32) + b2_ref[...]
        att = att2[:bt] + att2[bt:]
        scale_ref[...] = jax.nn.sigmoid(att)[:, :, None]


# ----------------------------------------------------------------------------
# Spatial-tiling fallback, pass 2: apply the gate chunk-by-chunk.
# ----------------------------------------------------------------------------
def _apply_gate_kernel(x_ref, scale_ref, o_ref):
    o_ref[...] = x_ref[...] * scale_ref[...].astype(o_ref.dtype)


# ----------------------------------------------------------------------------
# Helpers.
# ----------------------------------------------------------------------------
def _largest_divisor_leq(n, cap):
    cap = int(max(1, min(n, cap)))
    for d in range(cap, 0, -1):
        if n % d == 0:
            return d
    return 1


def _tpu_hw_budget():
    """(physical VMEM bytes, tensorcores per chip); conservative defaults."""
    vmem_bytes = 64 << 20        # smallest per-TC VMEM across generations (v7x)
    num_cores = 1                # single-TC default (v5e / v6e)
    get_info = getattr(pltpu, "get_tpu_info", None)
    if get_info is not None:
        try:
            info = get_info()
            vmem_bytes = int(getattr(info, "vmem_capacity_bytes", vmem_bytes))
            for attr in ("num_cores", "tensorcore_count", "num_tensorcores",
                         "cores_per_chip"):
                val = getattr(info, attr, None)
                if val:
                    num_cores = int(val)
                    break
        except Exception:
            pass
    return vmem_bytes, num_cores


# ----------------------------------------------------------------------------
# Public wrapper.
# ----------------------------------------------------------------------------
def temporal_gate(x, w1, b1, w2, b2, *,
                  target_block_bytes=4 << 20,
                  spatial_block_bytes=2 << 20,
                  force_spatial_tiling=False):
    """x: (B, F, D, H, W).  w1: (F//2, F), b1: (F//2, 1), w2: (F, F//2),
    b2: (F, 1) in PyTorch nn.Linear layout."""
    B, F, D, H, W = x.shape
    S = D * H * W
    F2 = w1.shape[0]
    dtype = x.dtype
    itemsize = jnp.dtype(dtype).itemsize

    x_flat = x.reshape(B, F, S)

    # Pre-transpose weights so the kernel runs row-major (rows, F) @ (F, F2).
    w1t = jnp.asarray(w1).T.astype(jnp.float32)         # (F, F2)
    w2t = jnp.asarray(w2).T.astype(jnp.float32)         # (F2, F)
    b1r = jnp.asarray(b1).reshape(1, F2).astype(jnp.float32)
    b2r = jnp.asarray(b2).reshape(1, F).astype(jnp.float32)

    vmem_bytes, num_cores = _tpu_hw_budget()
    # Leave headroom: never ask Mosaic for more than 3/8 of physical VMEM.
    vmem_limit_cap = int(min(48 << 20, (vmem_bytes * 3) // 8))

    bytes_per_b = F * S * itemsize
    weights_bytes = (w1t.size + w2t.size + b1r.size + b2r.size) * 4
    slack = 2 * weights_bytes + (2 << 20)
    # Budget: 2x input + 2x output double buffers + 1 block-sized temp + slack.
    fused_fits = 5 * bytes_per_b + slack <= vmem_limit_cap

    if not force_spatial_tiling and fused_fits:
        max_bt_vmem = max(1, (vmem_limit_cap - slack) // (5 * bytes_per_b))
        bt_cap = max(1, min(B, target_block_bytes // bytes_per_b, max_bt_vmem))
        if num_cores >= 2 and B >= num_cores:
            # Keep at least one grid step per TensorCore (megacore sharding);
            # skipped entirely on single-TC chips (v5e / v6e).
            bt_cap = min(bt_cap, B // num_cores)
        Bt = _largest_divisor_leq(B, bt_cap)

        need = 5 * Bt * bytes_per_b + slack
        vmem_limit = int(min(max(need, 8 << 20), vmem_limit_cap))

        out = pl.pallas_call(
            _fused_gate_kernel,
            out_shape=jax.ShapeDtypeStruct((B, F, S), dtype),
            grid_spec=pl.GridSpec(
                grid=(B // Bt,),
                in_specs=[
                    pl.BlockSpec((Bt, F, S), lambda b: (b, 0, 0)),
                    pl.BlockSpec((F, F2), lambda b: (0, 0)),
                    pl.BlockSpec((1, F2), lambda b: (0, 0)),
                    pl.BlockSpec((F2, F), lambda b: (0, 0)),
                    pl.BlockSpec((1, F), lambda b: (0, 0)),
                ],
                out_specs=pl.BlockSpec((Bt, F, S), lambda b: (b, 0, 0)),
            ),
            compiler_params=pltpu.CompilerParams(
                dimension_semantics=("parallel",),
                vmem_limit_bytes=vmem_limit,
            ),
        )(x_flat, w1t, b1r, w2t, b2r)
        return out.reshape(B, F, D, H, W)

    # ------------------------------------------------------------------
    # Spatial-tiling fallback (huge D*H*W per example, e.g. v7x 64 MiB VMEM):
    # pass 1 reduces S in 128-lane-multiple chunks and emits the (B,F,1) gate,
    # pass 2 re-streams x chunk-by-chunk and applies the gate.
    # ------------------------------------------------------------------
    sc = (spatial_block_bytes // (F * itemsize)) // 128 * 128
    if sc <= 0 or sc >= S:
        sc = S
    ns = -(-S // sc)
    chunk_bytes = F * sc * itemsize
    vmem_limit = int(min(max(8 << 20, 6 * chunk_bytes + slack), vmem_limit_cap))

    pool_kernel = functools.partial(_pool_mlp_kernel, s_true=S, sc=sc, ns=ns)
    scale = pl.pallas_call(
        pool_kernel,
        out_shape=jax.ShapeDtypeStruct((B, F, 1), jnp.float32),
        grid_spec=pltpu.PrefetchScalarGridSpec(
            num_scalar_prefetch=0,
            grid=(B, ns),
            in_specs=[
                pl.BlockSpec((1, F, sc), lambda b, s: (b, 0, s)),
                pl.BlockSpec((F, F2), lambda b, s: (0, 0)),
                pl.BlockSpec((1, F2), lambda b, s: (0, 0)),
                pl.BlockSpec((F2, F), lambda b, s: (0, 0)),
                pl.BlockSpec((1, F), lambda b, s: (0, 0)),
            ],
            out_specs=pl.BlockSpec((1, F, 1), lambda b, s: (b, 0, 0)),
            scratch_shapes=[
                pltpu.VMEM((1, F), jnp.float32),     # running sum
                pltpu.VMEM((1, F), jnp.float32),     # running max
            ],
        ),
        compiler_params=pltpu.CompilerParams(
            dimension_semantics=("parallel", "arbitrary"),
            vmem_limit_bytes=vmem_limit,
        ),
    )(x_flat, w1t, b1r, w2t, b2r)

    out = pl.pallas_call(
        _apply_gate_kernel,
        out_shape=jax.ShapeDtypeStruct((B, F, S), dtype),
        grid_spec=pl.GridSpec(
            grid=(B, ns),
            in_specs=[
                pl.BlockSpec((1, F, sc), lambda b, s: (b, 0, s)),
                pl.BlockSpec((1, F, 1), lambda b, s: (b, 0, 0)),
            ],
            out_specs=pl.BlockSpec((1, F, sc), lambda b, s: (b, 0, s)),
        ),
        compiler_params=pltpu.CompilerParams(
            dimension_semantics=("parallel", "parallel"),
            vmem_limit_bytes=vmem_limit,
        ),
    )(x_flat, scale)
    return out.reshape(B, F, D, H, W)


def temporal_gate_ref(x, w1, b1, w2, b2):
    """Pure-JAX reference matching the PyTorch forward (default path)."""
    B, F = x.shape[0], x.shape[1]
    xs = x.reshape(B, F, -1)
    avg = xs.mean(axis=-1)
    mx = xs.max(axis=-1)

    def mlp(v):  # v: (B, F)
        h = jnp.maximum(v @ w1.T + b1[:, 0], 0.0)
        return h @ w2.T + b2[:, 0]

    att = mlp(avg) + mlp(mx)
    scale = jax.nn.sigmoid(att)
    return x * scale[:, :, None, None, None]


# TODO(synk): tabattention / temporal_mhsa optional branches of TemporalGate are
# disabled in the default config and are not implemented here.

if __name__ == "__main__":
    key = jax.random.PRNGKey(0)
    kx, k1, k2, k3, k4, kx2 = jax.random.split(key, 6)

    # --- Test 1: fused single-pass path (gate_frames=16, spatial 4x8x8) ---
    B, F, D, H, W = 2, 16, 4, 8, 8
    F2 = F // 2
    x = jax.random.normal(kx, (B, F, D, H, W), dtype=jnp.float32)
    # Deterministic synthetic parameters (PyTorch Linear weight layout: (out, in)).
    w1 = 0.1 * jax.random.normal(k1, (F2, F), dtype=jnp.float32)
    b1 = 0.1 * jax.random.normal(k2, (F2, 1), dtype=jnp.float32)
    w2 = 0.1 * jax.random.normal(k3, (F, F2), dtype=jnp.float32)
    b2 = 0.1 * jax.random.normal(k4, (F, 1), dtype=jnp.float32)

    out = jax.block_until_ready(temporal_gate(x, w1, b1, w2, b2))
    ref = temporal_gate_ref(x, w1, b1, w2, b2)
    assert out.shape == x.shape
    assert jnp.allclose(out, ref, atol=1e-5, rtol=1e-5), (
        float(jnp.max(jnp.abs(out - ref))))

    # --- Test 2: spatial-tiling fallback (S=320, forced 128-lane chunks,
    #     exercises the ragged-tail masking and the two-pass gate) ---
    B2, D2, H2, W2 = 3, 5, 8, 8
    x2 = jax.random.normal(kx2, (B2, F, D2, H2, W2), dtype=jnp.float32)
    out2 = jax.block_until_ready(
        temporal_gate(x2, w1, b1, w2, b2,
                      force_spatial_tiling=True,
                      spatial_block_bytes=F * 128 * 4))
    ref2 = temporal_gate_ref(x2, w1, b1, w2, b2)
    assert out2.shape == x2.shape
    assert jnp.allclose(out2, ref2, atol=1e-5, rtol=1e-5), (
        float(jnp.max(jnp.abs(out2 - ref2))))

    print("KERNEL_OK")
</pallas_src>

<mosaic_0001>
module attributes {stable_mosaic.version = 11 : i64} {
  func.func @_fused_gate_kernel(%arg0: i32, %arg1: memref<2x16x256xf32, #tpu.memory_space<vmem>>, %arg2: memref<16x8xf32, #tpu.memory_space<vmem>>, %arg3: memref<1x8xf32, #tpu.memory_space<vmem>>, %arg4: memref<8x16xf32, #tpu.memory_space<vmem>>, %arg5: memref<1x16xf32, #tpu.memory_space<vmem>>, %arg6: memref<2x16x256xf32, #tpu.memory_space<vmem>>) attributes {dimension_semantics = [#tpu.dimension_semantics<parallel>], iteration_bounds = array<i64: 1>, scalar_prefetch = 0 : i64, scratch_operands = 0 : i64, tpu.core_type = #tpu.core_type<tc>, window_params = [{transform_indices = @transform_0, window_bounds = array<i64: 2, 16, 256>}, {pipeline_mode = #tpu.pipeline_mode<synchronous>, transform_indices = @transform_1, window_bounds = array<i64: 16, 8>}, {pipeline_mode = #tpu.pipeline_mode<synchronous>, transform_indices = @transform_2, window_bounds = array<i64: 1, 8>}, {pipeline_mode = #tpu.pipeline_mode<synchronous>, transform_indices = @transform_3, window_bounds = array<i64: 8, 16>}, {pipeline_mode = #tpu.pipeline_mode<synchronous>, transform_indices = @transform_4, window_bounds = array<i64: 1, 16>}, {transform_indices = @transform_5, window_bounds = array<i64: 2, 16, 256>}]} {
    %c0 = arith.constant 0 : index
    %c0_0 = arith.constant 0 : index
    %c0_1 = arith.constant 0 : index
    %0 = vector.load %arg1[%c0, %c0_0, %c0_1] : memref<2x16x256xf32, #tpu.memory_space<vmem>>, vector<2x16x256xf32>
    %cst = arith.constant dense<0.000000e+00> : vector<2x16xf32>
    %1 = vector.multi_reduction <add>, %0, %cst [2] : vector<2x16x256xf32> to vector<2x16xf32>
    %cst_2 = arith.constant dense<0xFF800000> : vector<2x16xf32>
    %2 = vector.multi_reduction <maximumf>, %0, %cst_2 [2] : vector<2x16x256xf32> to vector<2x16xf32>
    %cst_3 = arith.constant 3.906250e-03 : f32
    %3 = vector.broadcast %cst_3 : f32 to vector<2x16xf32>
    %4 = arith.mulf %1, %3 : vector<2x16xf32>
    %5 = tpu.concatenate %4, %2 in 0 : vector<2x16xf32>, vector<2x16xf32> -> vector<4x16xf32>
    %c0_4 = arith.constant 0 : index
    %c0_5 = arith.constant 0 : index
    %6 = vector.load %arg2[%c0_4, %c0_5] : memref<16x8xf32, #tpu.memory_space<vmem>>, vector<16x8xf32>
    %cst_6 = arith.constant dense<0.000000e+00> : vector<4x8xf32>
    %7 = tpu.matmul %5, %6, %cst_6 {dimension_numbers = #tpu.dot_dimension_numbers<[1], [0], [0], [1], [0, 0, 1, 1], [], []>} : vector<4x16xf32>, vector<16x8xf32>, vector<4x8xf32> -> vector<4x8xf32>
    %c0_7 = arith.constant 0 : index
    %c0_8 = arith.constant 0 : index
    %8 = vector.load %arg3[%c0_7, %c0_8] : memref<1x8xf32, #tpu.memory_space<vmem>>, vector<1x8xf32>
    %9 = vector.broadcast %8 : vector<1x8xf32> to vector<4x8xf32>
    %10 = arith.addf %7, %9 : vector<4x8xf32>
    %cst_9 = arith.constant 0.000000e+00 : f32
    %11 = vector.broadcast %cst_9 : f32 to vector<4x8xf32>
    %12 = arith.maximumf %10, %11 : vector<4x8xf32>
    %c0_10 = arith.constant 0 : index
    %c0_11 = arith.constant 0 : index
    %13 = vector.load %arg4[%c0_10, %c0_11] : memref<8x16xf32, #tpu.memory_space<vmem>>, vector<8x16xf32>
    %cst_12 = arith.constant dense<0.000000e+00> : vector<4x16xf32>
    %14 = tpu.matmul %12, %13, %cst_12 {dimension_numbers = #tpu.dot_dimension_numbers<[1], [0], [0], [1], [0, 0, 1, 1], [], []>} : vector<4x8xf32>, vector<8x16xf32>, vector<4x16xf32> -> vector<4x16xf32>
    %c0_13 = arith.constant 0 : index
    %c0_14 = arith.constant 0 : index
    %15 = vector.load %arg5[%c0_13, %c0_14] : memref<1x16xf32, #tpu.memory_space<vmem>>, vector<1x16xf32>
    %16 = vector.broadcast %15 : vector<1x16xf32> to vector<4x16xf32>
    %17 = arith.addf %14, %16 : vector<4x16xf32>
    %18 = vector.extract_strided_slice %17 {offsets = [0, 0], sizes = [2, 16], strides = [1, 1]} : vector<4x16xf32> to vector<2x16xf32>
    %19 = vector.extract_strided_slice %17 {offsets = [2, 0], sizes = [2, 16], strides = [1, 1]} : vector<4x16xf32> to vector<2x16xf32>
    %20 = arith.addf %18, %19 : vector<2x16xf32>
    %21 = arith.negf %20 : vector<2x16xf32>
    %22 = math.exp %21 : vector<2x16xf32>
    %cst_15 = arith.constant 1.000000e+00 : f32
    %23 = vector.broadcast %cst_15 : f32 to vector<2x16xf32>
    %24 = arith.addf %23, %22 : vector<2x16xf32>
    %25 = arith.divf %23, %24 : vector<2x16xf32>
    %26 = vector.shape_cast %25 : vector<2x16xf32> to vector<2x16x1xf32>
    %27 = vector.broadcast %26 : vector<2x16x1xf32> to vector<2x16x256xf32>
    %28 = arith.mulf %0, %27 : vector<2x16x256xf32>
    %c0_16 = arith.constant 0 : index
    %c0_17 = arith.constant 0 : index
    %c0_18 = arith.constant 0 : index
    %29 = vector.load %arg6[%c0_16, %c0_17, %c0_18] : memref<2x16x256xf32, #tpu.memory_space<vmem>>, vector<2x16x256xf32>
    tpu.vector_store %arg6[%c0_16, %c0_17, %c0_18], %28 {strides = array<i32>} : memref<2x16x256xf32, #tpu.memory_space<vmem>>, vector<2x16x256xf32>,
    return
  }
  func.func @transform_0(%arg0: i32) -> (i32, i32, i32) {
    %c0_i32 = arith.constant 0 : i32
    %c0_i32_0 = arith.constant 0 : i32
    %c0_i32_1 = arith.constant 0 : i32
    return %arg0, %c0_i32, %c0_i32_0 : i32, i32, i32
  }
  func.func @transform_1(%arg0: i32) -> (i32, i32) {
    %c0_i32 = arith.constant 0 : i32
    %c0_i32_0 = arith.constant 0 : i32
    %c0_i32_1 = arith.constant 0 : i32
    return %c0_i32, %c0_i32_0 : i32, i32
  }
  func.func @transform_2(%arg0: i32) -> (i32, i32) {
    %c0_i32 = arith.constant 0 : i32
    %c0_i32_0 = arith.constant 0 : i32
    %c0_i32_1 = arith.constant 0 : i32
    return %c0_i32, %c0_i32_0 : i32, i32
  }
  func.func @transform_3(%arg0: i32) -> (i32, i32) {
    %c0_i32 = arith.constant 0 : i32
    %c0_i32_0 = arith.constant 0 : i32
    %c0_i32_1 = arith.constant 0 : i32
    return %c0_i32, %c0_i32_0 : i32, i32
  }
  func.func @transform_4(%arg0: i32) -> (i32, i32) {
    %c0_i32 = arith.constant 0 : i32
    %c0_i32_0 = arith.constant 0 : i32
    %c0_i32_1 = arith.constant 0 : i32
    return %c0_i32, %c0_i32_0 : i32, i32
  }
  func.func @transform_5(%arg0: i32) -> (i32, i32, i32) {
    %c0_i32 = arith.constant 0 : i32
    %c0_i32_0 = arith.constant 0 : i32
    %c0_i32_1 = arith.constant 0 : i32
    return %arg0, %c0_i32, %c0_i32_0 : i32, i32, i32
  }
}

</mosaic_0001>

<llo_original>
// kernel: tpu_custom_call.1
$region0: #{tpu_custom_call.1}
  #allocation0 [shape = 'u32[]', space=smem, size = 0x4, offset = 0x4, fixed_abs, tag = 'smem constant byte address 0x4 - core index']
  #allocation1 [shape = 'u32[144,128]{1,0:T(1,128)}', space=vmem, size = 0x12000, scoped, tag = 'internal scratch']
  %s0 = inlined_call_operand.hbm [shape: f32[2,16,256], index: 0, kind: input, shape index: {}]
  %s1 = inlined_call_operand.vmem [shape: f32[16,8], index: 1, kind: input, shape index: {}]
  %s2 = inlined_call_operand.vmem [shape: f32[1,8], index: 2, kind: input, shape index: {}]
  %s3 = inlined_call_operand.vmem [shape: f32[8,16], index: 3, kind: input, shape index: {}]
  %s4 = inlined_call_operand.vmem [shape: f32[1,16], index: 4, kind: input, shape index: {}]
  %s5 = inlined_call_operand.hbm [shape: f32[2,16,256], index: 5, kind: output, shape index: {}]
  %s6 = sld [smem:[#allocation0]]
  $region34: #{tpu_custom_call.1} parent=0
    _
  %s8 = ssub.s32 1, %s6
  %s9 = scalar_select 0, %s8, %s6
  $region1: #{tpu_custom_call.1} parent=0
    #allocation2 [shape = 'u8[32768]{0}', space=vmem, size = 0x8000, scoped, tag = 'input window, operand 0, single buffered']
    #allocation3 [shape = 's32[1]{0}', space=sflag, size = 0x4, scoped, tag = 'scoped memory for tpu_custom_call.1']
    #allocation4 [shape = 's32[1]{0}', space=sflag, size = 0x4, scoped, tag = 'scoped memory for tpu_custom_call.1']
    #allocation5 [shape = 'u8[32768]{0}', space=vmem, size = 0x8000, scoped, tag = 'output window, operand 0, single buffered']
    %10 = vsyncpa [#allocation3], 0
    %11 = vsyncpa [#allocation4], 0
    // Predicated region
    $region2: #{tpu_custom_call.1} parent=1 // pred_check
      _
    $region3: #{tpu_custom_call.1} parent=1 // pred_check_branch
      %13 = sbr.rel (0) target = $region5
    $region4: #{tpu_custom_call.1} parent=1 // pred_region
      %s15 = ssub.s32 1024, 1024
      %16 = vsyncadd [#allocation3], %s15
      %s17 = sshll.u32 [#allocation2], 4
      %s18 = int_to_ptr.vmem [resolvable:$true] %s17
      %23 = dma.hbm_to_vmem [thread:$0]  %s0, 1024, %s18, [#allocation3], 256, 256, 16
    $region5: #{tpu_custom_call.1} parent=1 // pred_fallthru
      _
    // Predicated region
    $region6: #{tpu_custom_call.1} parent=1 // pred_check
      _
    $region7: #{tpu_custom_call.1} parent=1 // pred_check_branch
      %25 = sbr.rel (0) target = $region9
    $region8: #{tpu_custom_call.1} parent=1 // pred_region
      _
    $region9: #{tpu_custom_call.1} parent=1 // pred_fallthru
      _
    // Predicated region
    $region10: #{tpu_custom_call.1} parent=1 // pred_check
      _
    $region11: #{tpu_custom_call.1} parent=1 // pred_check_branch
      %27 = sbr.rel (0) target = $region13
    $region12: #{tpu_custom_call.1} parent=1 // pred_region
      _
    $region13: #{tpu_custom_call.1} parent=1 // pred_fallthru
      _
    // Predicated region
    $region14: #{tpu_custom_call.1} parent=1 // pred_check
      _
    $region15: #{tpu_custom_call.1} parent=1 // pred_check_branch
      %29 = sbr.rel (0) target = $region17
    $region16: #{tpu_custom_call.1} parent=1 // pred_region
      _
    $region17: #{tpu_custom_call.1} parent=1 // pred_fallthru
      _
    // Predicated region
    $region18: #{tpu_custom_call.1} parent=1 // pred_check
      _
    $region19: #{tpu_custom_call.1} parent=1 // pred_check_branch
      %31 = sbr.rel (0) target = $region21
    $region20: #{tpu_custom_call.1} parent=1 // pred_region
      _
    $region21: #{tpu_custom_call.1} parent=1 // pred_fallthru
      _
    // Predicated region
    $region22: #{tpu_custom_call.1} parent=1 // pred_check
      _
    $region23: #{tpu_custom_call.1} parent=1 // pred_check_branch
      %33 = sbr.rel (0) target = $region25
    $region24: #{tpu_custom_call.1} parent=1 // pred_region
      %34 = dma.done [#allocation3], 1024
    $region25: #{tpu_custom_call.1} parent=1 // pred_fallthru
      _
    %v35 = vld [vmem:[#allocation2] sm:$0xff]
    %v36 = vld [vmem:[#allocation2 + $0x8] sm:$0xff]
    %v37 = vld [vmem:[#allocation2 + $0x10] sm:$0xff]
    %v38 = vld [vmem:[#allocation2 + $0x18] sm:$0xff]
    %v39 = vld [vmem:[#allocation2 + $0x20] sm:$0xff]
    %v40 = vld [vmem:[#allocation2 + $0x28] sm:$0xff]
    %v41 = vld [vmem:[#allocation2 + $0x30] sm:$0xff]
    %v42 = vld [vmem:[#allocation2 + $0x38] sm:$0xff]
    %v43 = vadd.f32 %v35, %v36
    %44 = vadd.xlane.f32.xlu0 %v43
    %v45 = vpop.xlane.xlu0 %44
    %v46 = vadd.f32 %v37, %v38
    %47 = vadd.xlane.f32.xlu0 %v46
    %v48 = vpop.xlane.xlu0 %47
    %v49 = vadd.f32 %v39, %v40
    %50 = vadd.xlane.f32.xlu0 %v49
    %v51 = vpop.xlane.xlu0 %50
    %v52 = vadd.f32 %v41, %v42
    %53 = vadd.xlane.f32.xlu0 %v52
    %v54 = vpop.xlane.xlu0 %53
    %v55 = vmax.f32 %v35, %v36
    %56 = vmax.xlane.f32.xlu0 %v55
    %v57 = vpop.xlane.xlu0 %56
    %v58 = vmax.f32 %v37, %v38
    %59 = vmax.xlane.f32.xlu0 %v58
    %v60 = vpop.xlane.xlu0 %59
    %v61 = vmax.f32 %v39, %v40
    %62 = vmax.xlane.f32.xlu0 %v61
    %v63 = vpop.xlane.xlu0 %62
    %v64 = vmax.f32 %v41, %v42
    %65 = vmax.xlane.f32.xlu0 %v64
    %v66 = vpop.xlane.xlu0 %65
    %v67 = vmul.f32 %v45, 0.00390625
    %v68 = vmul.f32 %v48, 0.00390625
    %v69 = vmul.f32 %v51, 0.00390625
    %v70 = vmul.f32 %v54, 0.00390625
    %v75 = vlaneseq
    %v76 = vand.u32 %v75, 127
    %v77 = vlaneseq
    %v78 = vshrl.u32 %v77, 7
    %v79 = vsub.s32 %v76, %v78
    %v80 = vrot.slane %v67, %v79
    %v81 = vadd.s32 %v76, 4294967288
    %v82 = vlaneseq
    %v83 = vshrl.u32 %v82, 7
    %v84 = vsub.s32 %v81, %v83
    %v85 = vrot.slane %v68, %v84
    %vm86 = vcmask 130112
    %v87 = vsel %vm86, %v85, %v80
    %v88 = vlaneseq
    %v89 = vshrl.u32 %v88, 7
    %v90 = vsub.s32 %v76, %v89
    %v91 = vrot.slane %v69, %v90
    %v92 = vlaneseq
    %v93 = vshrl.u32 %v92, 7
    %v94 = vsub.s32 %v81, %v93
    %v95 = vrot.slane %v70, %v94
    %v96 = vsel %vm86, %v95, %v91
    %vm97 = vcmask 1041409
    %v98 = vsel %vm97, %v96, %v87
    %v104 = vlaneseq
    %v105 = vshrl.u32 %v104, 7
    %v106 = vsub.s32 %v76, %v105
    %v107 = vrot.slane %v57, %v106
    %v108 = vlaneseq
    %v109 = vshrl.u32 %v108, 7
    %v110 = vsub.s32 %v81, %v109
    %v111 = vrot.slane %v60, %v110
    %v112 = vsel %vm86, %v111, %v107
    %v113 = vlaneseq
    %v114 = vshrl.u32 %v113, 7
    %v115 = vsub.s32 %v76, %v114
    %v116 = vrot.slane %v63, %v115
    %v117 = vlaneseq
    %v118 = vshrl.u32 %v117, 7
    %v119 = vsub.s32 %v81, %v118
    %v120 = vrot.slane %v66, %v119
    %v121 = vsel %vm86, %v120, %v116
    %vm122 = vcmask 1043459
    %v123 = vsel %vm122, %v121, %v112
    %vm125 = vcmask 1041408
    %v126 = vsel %vm125, %v98, %v123
    %v127 = vld [vmem:[%s1] sm:$0xff]
    %v128 = vld [vmem:[%s1 + $0x8] sm:$0xff]
    %v129 = vld [vmem:[%s2] sm:$0x1]
    %v131 = vlaneseq
    %v132 = vshrl.u32 %v131, 7
    %v133 = vsub.s32 0, %v132
    %v134 = vrot.slane %v129, %v133
    %vm136 = vcmask 130048
    %v138 = vsel %vm136, %v126, 0
    %140 = vmatprep.subr.mxu0 0.0
    %141 = vmatpush1.msra.mxu0 0.0
    %142 = vmatprep.subr.mxu0 0.0
    %143 = vmatpush1.msra.mxu0 0.0
    %144 = vmatprep.subr.mxu0 0.0
    %145 = vmatpush1.msra.mxu0 0.0
    %146 = vmatprep.subr.mxu0 0.0
    %147 = vmatpush1.msra.mxu0 0.0
    %148 = vmatprep.subr.mxu0 0.0
    %149 = vmatpush1.msra.mxu0 0.0
    %150 = vmatprep.subr.mxu0 0.0
    %151 = vmatpush1.msra.mxu0 0.0
    %152 = vmatprep.subr.mxu0 0.0
    %153 = vmatpush1.msra.mxu0 0.0
    %154 = vmatprep.subr.mxu0 0.0
    %155 = vmatpush1.msra.mxu0 0.0
    %156 = vmatprep.subr.mxu0 0.0
    %157 = vmatpush1.msra.mxu0 0.0
    %158 = vmatprep.subr.mxu0 0.0
    %159 = vmatpush1.msra.mxu0 0.0
    %160 = vmatprep.subr.mxu0 0.0
    %161 = vmatpush1.msra.mxu0 0.0
    %162 = vmatprep.subr.mxu0 0.0
    %163 = vmatpush1.msra.mxu0 0.0
    %164 = vmatprep.subr.mxu0 0.0
    %165 = vmatpush1.msra.mxu0 0.0
    %166 = vmatprep.subr.mxu0 0.0
    %167 = vmatpush1.msra.mxu0 0.0
    %168 = vmatprep.subr.mxu0 0.0
    %169 = vmatpush1.msra.mxu0 %v128
    %170 = vmatprep.subr.mxu0 0.0
    %171 = vmatpush1.msra.mxu0 %v127
    %172 = vmatprep.subr.mxu0 0.0
    %173 = vmatpush2.msra.mxu0 0.0
    %174 = vmatprep.subr.mxu0 0.0
    %175 = vmatpush2.msra.mxu0 0.0
    %176 = vmatprep.subr.mxu0 0.0
    %177 = vmatpush2.msra.mxu0 0.0
    %178 = vmatprep.subr.mxu0 0.0
    %179 = vmatpush2.msra.mxu0 0.0
    %180 = vmatprep.subr.mxu0 0.0
    %181 = vmatpush2.msra.mxu0 0.0
    %182 = vmatprep.subr.mxu0 0.0
    %183 = vmatpush2.msra.mxu0 0.0
    %184 = vmatprep.subr.mxu0 0.0
    %185 = vmatpush2.msra.mxu0 0.0
    %186 = vmatprep.subr.mxu0 0.0
    %187 = vmatpush2.msra.mxu0 0.0
    %188 = vmatprep.subr.mxu0 0.0
    %189 = vmatpush2.msra.mxu0 0.0
    %190 = vmatprep.subr.mxu0 0.0
    %191 = vmatpush2.msra.mxu0 0.0
    %192 = vmatprep.subr.mxu0 0.0
    %193 = vmatpush2.msra.mxu0 0.0
    %194 = vmatprep.subr.mxu0 0.0
    %195 = vmatpush2.msra.mxu0 0.0
    %196 = vmatprep.subr.mxu0 0.0
    %197 = vmatpush2.msra.mxu0 0.0
    %198 = vmatprep.subr.mxu0 0.0
    %199 = vmatpush2.msra.mxu0 0.0
    %200 = vmatprep.subr.mxu0 0.0
    %201 = vmatpush2.msra.mxu0 0.0
    %202 = vmatprep.subr.mxu0 0.0
    %203 = vmatpush2.msra.mxu0 0.0
    %204 = vmatprep.mubr.f32.mxu0 0.0
    %205 = vmatmul.mubr.f32.gmra.mxu0 %v138
    %v206 = vpop.f32.mrf.mxu0
    %v207 = vadd.f32 %v134, %v206
    %v208 = vpop.f32.mrf.mxu0
    %209 = vdwg.mxu0
    %v210 = vmax.f32 %v207, 0.0
    %v211 = vld [vmem:[%s3] sm:$0xff]
    %v212 = vld [vmem:[%s4] sm:$0x1]
    %v214 = vlaneseq
    %v215 = vshrl.u32 %v214, 7
    %v216 = vsub.s32 0, %v215
    %v217 = vrot.slane %v212, %v216
    %vm219 = vcmask 64512
    %v221 = vsel %vm219, %v210, 0
    %223 = vmatprep.subr.mxu0 0.0
    %224 = vmatpush1.msra.mxu0 0.0
    %225 = vmatprep.subr.mxu0 0.0
    %226 = vmatpush1.msra.mxu0 0.0
    %227 = vmatprep.subr.mxu0 0.0
    %228 = vmatpush1.msra.mxu0 0.0
    %229 = vmatprep.subr.mxu0 0.0
    %230 = vmatpush1.msra.mxu0 0.0
    %231 = vmatprep.subr.mxu0 0.0
    %232 = vmatpush1.msra.mxu0 0.0
    %233 = vmatprep.subr.mxu0 0.0
    %234 = vmatpush1.msra.mxu0 0.0
    %235 = vmatprep.subr.mxu0 0.0
    %236 = vmatpush1.msra.mxu0 0.0
    %237 = vmatprep.subr.mxu0 0.0
    %238 = vmatpush1.msra.mxu0 0.0
    %239 = vmatprep.subr.mxu0 0.0
    %240 = vmatpush1.msra.mxu0 0.0
    %241 = vmatprep.subr.mxu0 0.0
    %242 = vmatpush1.msra.mxu0 0.0
    %243 = vmatprep.subr.mxu0 0.0
    %244 = vmatpush1.msra.mxu0 0.0
    %245 = vmatprep.subr.mxu0 0.0
    %246 = vmatpush1.msra.mxu0 0.0
    %247 = vmatprep.subr.mxu0 0.0
    %248 = vmatpush1.msra.mxu0 0.0
    %249 = vmatprep.subr.mxu0 0.0
    %250 = vmatpush1.msra.mxu0 0.0
    %251 = vmatprep.subr.mxu0 0.0
    %252 = vmatpush1.msra.mxu0 0.0
    %253 = vmatprep.subr.mxu0 0.0
    %254 = vmatpush1.msra.mxu0 %v211
    %255 = vmatprep.subr.mxu0 0.0
    %256 = vmatpush2.msra.mxu0 0.0
    %257 = vmatprep.subr.mxu0 0.0
    %258 = vmatpush2.msra.mxu0 0.0
    %259 = vmatprep.subr.mxu0 0.0
    %260 = vmatpush2.msra.mxu0 0.0
    %261 = vmatprep.subr.mxu0 0.0
    %262 = vmatpush2.msra.mxu0 0.0
    %263 = vmatprep.subr.mxu0 0.0
    %264 = vmatpush2.msra.mxu0 0.0
    %265 = vmatprep.subr.mxu0 0.0
    %266 = vmatpush2.msra.mxu0 0.0
    %267 = vmatprep.subr.mxu0 0.0
    %268 = vmatpush2.msra.mxu0 0.0
    %269 = vmatprep.subr.mxu0 0.0
    %270 = vmatpush2.msra.mxu0 0.0
    %271 = vmatprep.subr.mxu0 0.0
    %272 = vmatpush2.msra.mxu0 0.0
    %273 = vmatprep.subr.mxu0 0.0
    %274 = vmatpush2.msra.mxu0 0.0
    %275 = vmatprep.subr.mxu0 0.0
    %276 = vmatpush2.msra.mxu0 0.0
    %277 = vmatprep.subr.mxu0 0.0
    %278 = vmatpush2.msra.mxu0 0.0
    %279 = vmatprep.subr.mxu0 0.0
    %280 = vmatpush2.msra.mxu0 0.0
    %281 = vmatprep.subr.mxu0 0.0
    %282 = vmatpush2.msra.mxu0 0.0
    %283 = vmatprep.subr.mxu0 0.0
    %284 = vmatpush2.msra.mxu0 0.0
    %285 = vmatprep.subr.mxu0 0.0
    %286 = vmatpush2.msra.mxu0 0.0
    %287 = vmatprep.mubr.f32.mxu0 0.0
    %288 = vmatmul.mubr.f32.gmra.mxu0 %v221
    %v289 = vpop.f32.mrf.mxu0
    %v290 = vadd.f32 %v217, %v289
    %v291 = vpop.f32.mrf.mxu0
    %292 = vdwg.mxu0
    %v294 = vrot.slane %v290, 2
    %v296 = vadd.f32 %v290, %v294
    %v297 = vxor.u32 %v296, 2147483648
    %v298 = vmul.f32 %v297, 1.442695
    %v299 = vpow.pop %v298
    %v300 = vadd.f32 %v299, 1.0
    %v301 = vrcp.pop %v300
    %v302 = vmul.f32 1.0, %v301
    %v303 = vlaneseq
    %v304 = vshrl.u32 %v303, 7
    %v305 = vsub.s32 0, %v304
    %v306 = vrot.slane %v302, %v305
    %308 = vbcast.lane.b32.xlu0 %v306, 256
    %v309 = vpop.permute.xlu0 %308
    %s311 = sor.u32 256, 8
    %312 = vbcast.lane.b32.xlu0 %v306, %s311
    %v313 = vpop.permute.xlu0 %312
    %v314 = vlaneseq
    %v315 = vshrl.u32 %v314, 7
    %v316 = vsub.s32 1, %v315
    %v317 = vrot.slane %v302, %v316
    %319 = vbcast.lane.b32.xlu0 %v317, 256
    %v320 = vpop.permute.xlu0 %319
    %s322 = sor.u32 256, 8
    %323 = vbcast.lane.b32.xlu0 %v317, %s322
    %v324 = vpop.permute.xlu0 %323
    %v325 = vmul.f32 %v35, %v309
    %v326 = vmul.f32 %v36, %v309
    %v327 = vmul.f32 %v37, %v313
    %v328 = vmul.f32 %v38, %v313
    %v329 = vmul.f32 %v39, %v320
    %v330 = vmul.f32 %v40, %v320
    %v331 = vmul.f32 %v41, %v324
    %v332 = vmul.f32 %v42, %v324
    %333 = vst [vmem:[#allocation5] sm:$0xff] %v325
    %334 = vst [vmem:[#allocation5 + $0x8] sm:$0xff] %v326
    %335 = vst [vmem:[#allocation5 + $0x10] sm:$0xff] %v327
    %336 = vst [vmem:[#allocation5 + $0x18] sm:$0xff] %v328
    %337 = vst [vmem:[#allocation5 + $0x20] sm:$0xff] %v329
    %338 = vst [vmem:[#allocation5 + $0x28] sm:$0xff] %v330
    %339 = vst [vmem:[#allocation5 + $0x30] sm:$0xff] %v331
    %340 = vst [vmem:[#allocation5 + $0x38] sm:$0xff] %v332
    // Predicated region
    $region26: #{tpu_custom_call.1} parent=1 // pred_check
      _
    $region27: #{tpu_custom_call.1} parent=1 // pred_check_branch
      %342 = sbr.rel (0) target = $region29
    $region28: #{tpu_custom_call.1} parent=1 // pred_region
      %s344 = ssub.s32 1024, 1024
      %345 = vsyncadd [#allocation4], %s344
      %s346 = sshll.u32 [#allocation5], 4
      %s347 = int_to_ptr.vmem [resolvable:$true] %s346
      %352 = dma.vmem_to_hbm [thread:$0]  %s347, 1024, %s5, [#allocation4], 256, 256, 16
    $region29: #{tpu_custom_call.1} parent=1 // pred_fallthru
      _
    // Predicated region
    $region30: #{tpu_custom_call.1} parent=1 // pred_check
      _
    $region31: #{tpu_custom_call.1} parent=1 // pred_check_branch
      %354 = sbr.rel (0) target = $region33
    $region32: #{tpu_custom_call.1} parent=1 // pred_region
      %355 = dma.done [#allocation4], 1024
    $region33: #{tpu_custom_call.1} parent=1 // pred_fallthru
      _
    %356 = vsyncpa [#allocation3], 1
    %357 = vsyncpa [#allocation4], 1

</llo_original>
